<compile_context>
chip_gen: v7x
topology: tpu7x:2x2x1
jax: 0.10.0
libtpu: 0.0.40
codegen_flags: <defaults>
</compile_context>

<pallas_src>
import functools

import jax
import jax.numpy as jnp
from jax.experimental import pallas as pl
from jax.experimental.pallas import tpu as pltpu


# ---------------------------------------------------------------------------
# Pass 1: per-(B, C) sum and sum-of-squares over the spatial (N*T) axis.
# ---------------------------------------------------------------------------
def _stats_kernel(x_ref, sum_ref, sumsq_ref):
    @pl.when(pl.program_id(1) == 0)
    def _():
        sum_ref[...] = jnp.zeros_like(sum_ref)
        sumsq_ref[...] = jnp.zeros_like(sumsq_ref)

    x = x_ref[...].astype(jnp.float32)                 # [1, TS, C]
    sum_ref[...] += jnp.sum(x, axis=1, keepdims=True)
    sumsq_ref[...] += jnp.sum(x * x, axis=1, keepdims=True)


def _spatial_stats(x3, ts):
    B, S, C = x3.shape
    return pl.pallas_call(
        _stats_kernel,
        out_shape=(jax.ShapeDtypeStruct((B, 1, C), jnp.float32),
                   jax.ShapeDtypeStruct((B, 1, C), jnp.float32)),
        grid_spec=pltpu.PrefetchScalarGridSpec(
            num_scalar_prefetch=0,
            grid=(B, S // ts),
            in_specs=[pl.BlockSpec((1, ts, C), lambda b, s: (b, s, 0))],
            out_specs=(pl.BlockSpec((1, 1, C), lambda b, s: (b, 0, 0)),
                       pl.BlockSpec((1, 1, C), lambda b, s: (b, 0, 0)))),
        compiler_params=pltpu.CompilerParams(
            dimension_semantics=("parallel", "arbitrary")),
    )(x3)


# ---------------------------------------------------------------------------
# Pass 2: out = x * scale + shift with per-(B, C) scale/shift (norm + affine
# folded into a single fused multiply-add per element).
# ---------------------------------------------------------------------------
def _apply_kernel(x_ref, scale_ref, shift_ref, o_ref):
    x = x_ref[...].astype(jnp.float32)                 # [1, TS, C]
    o_ref[...] = (x * scale_ref[...] + shift_ref[...]).astype(o_ref.dtype)


def _apply_affine(x3, scale, shift, ts):
    B, S, C = x3.shape
    return pl.pallas_call(
        _apply_kernel,
        out_shape=jax.ShapeDtypeStruct((B, S, C), x3.dtype),
        grid_spec=pltpu.PrefetchScalarGridSpec(
            num_scalar_prefetch=0,
            grid=(B, S // ts),
            in_specs=[pl.BlockSpec((1, ts, C), lambda b, s: (b, s, 0)),
                      pl.BlockSpec((1, 1, C), lambda b, s: (b, 0, 0)),
                      pl.BlockSpec((1, 1, C), lambda b, s: (b, 0, 0))],
            out_specs=pl.BlockSpec((1, ts, C), lambda b, s: (b, s, 0))),
        compiler_params=pltpu.CompilerParams(
            dimension_semantics=("parallel", "parallel")),
    )(x3, scale, shift)


def _pick_spatial_tile(s, c, itemsize=4, max_block_bytes=2 * 1024 * 1024):
    """Largest spatial tile that divides S, is a multiple of 8 (sublane rule)
    and keeps a (1, TS, C) block comfortably inside v7x's scoped VMEM."""
    cap = max(8, max_block_bytes // max(1, c * itemsize))
    for t in (1024, 512, 256, 128, 64, 32, 16, 8):
        if t <= min(s, cap) and s % t == 0:
            return t
    return s   # full-axis block is always a legal fallback


# ---------------------------------------------------------------------------
# SwitchNorm2d forward.
# ---------------------------------------------------------------------------
def switch_norm_2d(x, weight, bias, mean_weight, var_weight,
                   running_mean=None, running_var=None, *,
                   eps=1e-5, momentum=0.997, using_bn=True,
                   training=True, using_moving_average=True):
    """Forward pass of SwitchNorm2d.

    x            : [B, N, T, C]
    weight, bias : broadcastable to C (module shape (1, 1, 1, C))
    mean_weight  : [3] if using_bn else [2] (pre-softmax mixing logits)
    var_weight   : [3] if using_bn else [2]
    running_mean, running_var : [C] buffers (only used when using_bn)

    Returns (out [B, N, T, C], new_running_mean, new_running_var).
    """
    B, N, T, C = x.shape
    S = N * T
    x3 = x.reshape(B, S, C)                 # channels stay on the lane dim
    ts = _pick_spatial_tile(S, C)

    sum_bc, sumsq_bc = _spatial_stats(x3, ts)          # each [B, 1, C] f32

    # --- tiny O(B*C) statistics mixing (plain JAX; negligible work) ---------
    cnt = jnp.float32(S)
    mean_in = sum_bc / cnt                             # [B, 1, C]
    # torch Tensor.var defaults to the unbiased estimator (divide by S - 1).
    var_in = (sumsq_bc - cnt * mean_in * mean_in) / (cnt - 1.0)
    mean_ln = jnp.mean(mean_in, axis=2, keepdims=True)             # [B, 1, 1]
    temp = var_in + mean_in * mean_in
    var_ln = jnp.mean(temp, axis=2, keepdims=True) - mean_ln ** 2  # [B, 1, 1]

    mw = jax.nn.softmax(mean_weight.astype(jnp.float32))
    vw = jax.nn.softmax(var_weight.astype(jnp.float32))

    new_running_mean, new_running_var = running_mean, running_var
    if using_bn:
        if training:
            mean_bn = jnp.mean(mean_in, axis=0, keepdims=True)     # [1, 1, C]
            var_bn = jnp.mean(temp, axis=0, keepdims=True) - mean_bn ** 2
            # TODO(synk): PyTorch mutates the running_mean/var buffers in place;
            # here the updated buffers are returned functionally instead.
            if using_moving_average:
                new_running_mean = momentum * running_mean + (1.0 - momentum) * mean_bn[0, 0]
                new_running_var = momentum * running_var + (1.0 - momentum) * var_bn[0, 0]
            else:
                new_running_mean = running_mean + mean_bn[0, 0]
                new_running_var = running_var + mean_bn[0, 0] ** 2 + var_bn[0, 0]
        else:
            mean_bn = running_mean.reshape(1, 1, C).astype(jnp.float32)
            var_bn = running_var.reshape(1, 1, C).astype(jnp.float32)
        mean = mw[0] * mean_in + mw[1] * mean_ln + mw[2] * mean_bn
        var = vw[0] * var_in + vw[1] * var_ln + vw[2] * var_bn
    else:
        mean = mw[0] * mean_in + mw[1] * mean_ln
        var = vw[0] * var_in + vw[1] * var_ln

    inv_std = 1.0 / jnp.sqrt(var + eps)                # [B, 1, C]
    gamma = weight.reshape(1, 1, C).astype(jnp.float32)
    beta = bias.reshape(1, 1, C).astype(jnp.float32)
    # Fold (x - mean) / std * gamma + beta into one scale/shift per (B, C).
    scale = gamma * inv_std                            # [B, 1, C]
    shift = beta - mean * scale                        # [B, 1, C]

    out3 = _apply_affine(x3, scale, shift, ts)
    return out3.reshape(B, N, T, C), new_running_mean, new_running_var


# ---------------------------------------------------------------------------
# Pure-JAX reference mirroring the PyTorch forward (for correctness check).
# ---------------------------------------------------------------------------
def switch_norm_2d_ref(x, weight, bias, mean_weight, var_weight,
                       running_mean=None, running_var=None, *,
                       eps=1e-5, using_bn=True, training=True):
    B, N, T, C = x.shape
    xr = jnp.transpose(x, (0, 3, 1, 2)).reshape(B, C, -1)          # [B, C, S]
    mean_in = jnp.mean(xr, axis=-1, keepdims=True)
    var_in = jnp.var(xr, axis=-1, keepdims=True, ddof=1)
    mean_ln = jnp.mean(mean_in, axis=1, keepdims=True)
    temp = var_in + mean_in ** 2
    var_ln = jnp.mean(temp, axis=1, keepdims=True) - mean_ln ** 2
    mw = jax.nn.softmax(mean_weight)
    vw = jax.nn.softmax(var_weight)
    if using_bn:
        if training:
            mean_bn = jnp.mean(mean_in, axis=0, keepdims=True)
            var_bn = jnp.mean(temp, axis=0, keepdims=True) - mean_bn ** 2
        else:
            mean_bn = running_mean.reshape(1, C, 1)
            var_bn = running_var.reshape(1, C, 1)
        mean = mw[0] * mean_in + mw[1] * mean_ln + mw[2] * mean_bn
        var = vw[0] * var_in + vw[1] * var_ln + vw[2] * var_bn
    else:
        mean = mw[0] * mean_in + mw[1] * mean_ln
        var = vw[0] * var_in + vw[1] * var_ln
    xn = (xr - mean) / jnp.sqrt(var + eps)
    xn = xn.reshape(B, C, N, T).transpose(0, 2, 3, 1)
    return weight.reshape(1, 1, 1, C) * xn + bias.reshape(1, 1, 1, C)


# ---------------------------------------------------------------------------
if __name__ == "__main__":
    # Small shapes consistent with the module's [B, N, T, C] input; C = 128
    # keeps the channel (lane) dimension dense on TPU.
    B, N, T, C = 2, 8, 16, 128
    key = jax.random.PRNGKey(0)
    kx, kw, kb, km, kv = jax.random.split(key, 5)

    x = jax.random.normal(kx, (B, N, T, C), jnp.float32)
    # Learnable parameters (module init is ones/zeros; use non-trivial values
    # so the affine and softmax-mixing paths are actually exercised).
    weight = 1.0 + 0.1 * jax.random.normal(kw, (1, 1, 1, C), jnp.float32)
    bias = 0.1 * jax.random.normal(kb, (1, 1, 1, C), jnp.float32)
    mean_weight = jax.random.normal(km, (3,), jnp.float32)
    var_weight = jax.random.normal(kv, (3,), jnp.float32)
    # Buffers (module init: zeros).
    running_mean = jnp.zeros((C,), jnp.float32)
    running_var = jnp.zeros((C,), jnp.float32)

    fwd = jax.jit(functools.partial(
        switch_norm_2d, eps=1e-5, momentum=0.997,
        using_bn=True, training=True, using_moving_average=True))
    out, new_rm, new_rv = fwd(x, weight, bias, mean_weight, var_weight,
                              running_mean, running_var)
    out = jax.block_until_ready(out)

    # Correctness check against the pure-JAX reference of the PyTorch forward.
    ref = switch_norm_2d_ref(x, weight, bias, mean_weight, var_weight,
                             running_mean, running_var,
                             eps=1e-5, using_bn=True, training=True)
    assert out.shape == (B, N, T, C)
    assert new_rm.shape == (C,) and new_rv.shape == (C,)
    max_err = float(jnp.max(jnp.abs(out - ref)))
    assert max_err < 2e-4, f"max abs error {max_err}"
    print("KERNEL_OK")
</pallas_src>

<mosaic_0001>
module attributes {stable_mosaic.version = 11 : i64} {
  func.func @_stats_kernel(%arg0: i32, %arg1: i32, %arg2: memref<1x128x128xf32, #tpu.memory_space<vmem>>, %arg3: memref<1x1x128xf32, #tpu.memory_space<vmem>>, %arg4: memref<1x1x128xf32, #tpu.memory_space<vmem>>) attributes {dimension_semantics = [#tpu.dimension_semantics<parallel>, #tpu.dimension_semantics<arbitrary>], iteration_bounds = array<i64: 2, 1>, scalar_prefetch = 0 : i64, scratch_operands = 0 : i64, tpu.core_type = #tpu.core_type<tc>, window_params = [{transform_indices = @transform_0, window_bounds = array<i64: 1, 128, 128>}, {transform_indices = @transform_1, window_bounds = array<i64: 1, 1, 128>}, {transform_indices = @transform_2, window_bounds = array<i64: 1, 1, 128>}]} {
    %c0_i32 = arith.constant 0 : i32
    %0 = arith.cmpi eq, %arg1, %c0_i32 : i32
    %1 = arith.extui %0 : i1 to i32
    %c0_i32_0 = arith.constant 0 : i32
    %2 = arith.cmpi ne, %1, %c0_i32_0 : i32
    scf.if %2 {
      %cst_16 = arith.constant 0.000000e+00 : f32
      %15 = vector.broadcast %cst_16 : f32 to vector<1x1x128xf32>
      %c0_17 = arith.constant 0 : index
      %c0_18 = arith.constant 0 : index
      %c0_19 = arith.constant 0 : index
      %16 = vector.load %arg3[%c0_17, %c0_18, %c0_19] : memref<1x1x128xf32, #tpu.memory_space<vmem>>, vector<1x1x128xf32>
      tpu.vector_store %arg3[%c0_17, %c0_18, %c0_19], %15 {strides = array<i32>} : memref<1x1x128xf32, #tpu.memory_space<vmem>>, vector<1x1x128xf32>,
      %cst_20 = arith.constant 0.000000e+00 : f32
      %17 = vector.broadcast %cst_20 : f32 to vector<1x1x128xf32>
      %c0_21 = arith.constant 0 : index
      %c0_22 = arith.constant 0 : index
      %c0_23 = arith.constant 0 : index
      %18 = vector.load %arg4[%c0_21, %c0_22, %c0_23] : memref<1x1x128xf32, #tpu.memory_space<vmem>>, vector<1x1x128xf32>
      tpu.vector_store %arg4[%c0_21, %c0_22, %c0_23], %17 {strides = array<i32>} : memref<1x1x128xf32, #tpu.memory_space<vmem>>, vector<1x1x128xf32>,
    } else {
    }
    %c0 = arith.constant 0 : index
    %c0_1 = arith.constant 0 : index
    %c0_2 = arith.constant 0 : index
    %3 = vector.load %arg2[%c0, %c0_1, %c0_2] : memref<1x128x128xf32, #tpu.memory_space<vmem>>, vector<1x128x128xf32>
    %c0_3 = arith.constant 0 : index
    %c0_4 = arith.constant 0 : index
    %c0_5 = arith.constant 0 : index
    %4 = vector.load %arg3[%c0_3, %c0_4, %c0_5] : memref<1x1x128xf32, #tpu.memory_space<vmem>>, vector<1x1x128xf32>
    %cst = arith.constant dense<0.000000e+00> : vector<1x128xf32>
    %5 = vector.multi_reduction <add>, %3, %cst [1] : vector<1x128x128xf32> to vector<1x128xf32>
    %6 = vector.shape_cast %5 : vector<1x128xf32> to vector<1x1x128xf32>
    %7 = arith.addf %4, %6 : vector<1x1x128xf32>
    %c0_6 = arith.constant 0 : index
    %c0_7 = arith.constant 0 : index
    %c0_8 = arith.constant 0 : index
    %8 = vector.load %arg3[%c0_6, %c0_7, %c0_8] : memref<1x1x128xf32, #tpu.memory_space<vmem>>, vector<1x1x128xf32>
    tpu.vector_store %arg3[%c0_6, %c0_7, %c0_8], %7 {strides = array<i32>} : memref<1x1x128xf32, #tpu.memory_space<vmem>>, vector<1x1x128xf32>,
    %c0_9 = arith.constant 0 : index
    %c0_10 = arith.constant 0 : index
    %c0_11 = arith.constant 0 : index
    %9 = vector.load %arg4[%c0_9, %c0_10, %c0_11] : memref<1x1x128xf32, #tpu.memory_space<vmem>>, vector<1x1x128xf32>
    %10 = arith.mulf %3, %3 : vector<1x128x128xf32>
    %cst_12 = arith.constant dense<0.000000e+00> : vector<1x128xf32>
    %11 = vector.multi_reduction <add>, %10, %cst_12 [1] : vector<1x128x128xf32> to vector<1x128xf32>
    %12 = vector.shape_cast %11 : vector<1x128xf32> to vector<1x1x128xf32>
    %13 = arith.addf %9, %12 : vector<1x1x128xf32>
    %c0_13 = arith.constant 0 : index
    %c0_14 = arith.constant 0 : index
    %c0_15 = arith.constant 0 : index
    %14 = vector.load %arg4[%c0_13, %c0_14, %c0_15] : memref<1x1x128xf32, #tpu.memory_space<vmem>>, vector<1x1x128xf32>
    tpu.vector_store %arg4[%c0_13, %c0_14, %c0_15], %13 {strides = array<i32>} : memref<1x1x128xf32, #tpu.memory_space<vmem>>, vector<1x1x128xf32>,
    return
  }
  func.func @transform_0(%arg0: i32, %arg1: i32) -> (i32, i32, i32) {
    %c0_i32 = arith.constant 0 : i32
    %c0_i32_0 = arith.constant 0 : i32
    return %arg0, %arg1, %c0_i32 : i32, i32, i32
  }
  func.func @transform_1(%arg0: i32, %arg1: i32) -> (i32, i32, i32) {
    %c0_i32 = arith.constant 0 : i32
    %c0_i32_0 = arith.constant 0 : i32
    %c0_i32_1 = arith.constant 0 : i32
    return %arg0, %c0_i32, %c0_i32_0 : i32, i32, i32
  }
  func.func @transform_2(%arg0: i32, %arg1: i32) -> (i32, i32, i32) {
    %c0_i32 = arith.constant 0 : i32
    %c0_i32_0 = arith.constant 0 : i32
    %c0_i32_1 = arith.constant 0 : i32
    return %arg0, %c0_i32, %c0_i32_0 : i32, i32, i32
  }
}

module attributes {stable_mosaic.version = 11 : i64} {
  func.func @_apply_kernel(%arg0: i32, %arg1: i32, %arg2: memref<1x128x128xf32, #tpu.memory_space<vmem>>, %arg3: memref<1x1x128xf32, #tpu.memory_space<vmem>>, %arg4: memref<1x1x128xf32, #tpu.memory_space<vmem>>, %arg5: memref<1x128x128xf32, #tpu.memory_space<vmem>>) attributes {dimension_semantics = [#tpu.dimension_semantics<parallel>, #tpu.dimension_semantics<parallel>], iteration_bounds = array<i64: 2, 1>, scalar_prefetch = 0 : i64, scratch_operands = 0 : i64, tpu.core_type = #tpu.core_type<tc>, window_params = [{transform_indices = @transform_0, window_bounds = array<i64: 1, 128, 128>}, {transform_indices = @transform_1, window_bounds = array<i64: 1, 1, 128>}, {transform_indices = @transform_2, window_bounds = array<i64: 1, 1, 128>}, {transform_indices = @transform_3, window_bounds = array<i64: 1, 128, 128>}]} {
    %c0 = arith.constant 0 : index
    %c0_0 = arith.constant 0 : index
    %c0_1 = arith.constant 0 : index
    %0 = vector.load %arg2[%c0, %c0_0, %c0_1] : memref<1x128x128xf32, #tpu.memory_space<vmem>>, vector<1x128x128xf32>
    %c0_2 = arith.constant 0 : index
    %c0_3 = arith.constant 0 : index
    %c0_4 = arith.constant 0 : index
    %1 = vector.load %arg3[%c0_2, %c0_3, %c0_4] : memref<1x1x128xf32, #tpu.memory_space<vmem>>, vector<1x1x128xf32>
    %2 = vector.broadcast %1 : vector<1x1x128xf32> to vector<1x128x128xf32>
    %3 = arith.mulf %0, %2 : vector<1x128x128xf32>
    %c0_5 = arith.constant 0 : index
    %c0_6 = arith.constant 0 : index
    %c0_7 = arith.constant 0 : index
    %4 = vector.load %arg4[%c0_5, %c0_6, %c0_7] : memref<1x1x128xf32, #tpu.memory_space<vmem>>, vector<1x1x128xf32>
    %5 = vector.broadcast %4 : vector<1x1x128xf32> to vector<1x128x128xf32>
    %6 = arith.addf %3, %5 : vector<1x128x128xf32>
    %c0_8 = arith.constant 0 : index
    %c0_9 = arith.constant 0 : index
    %c0_10 = arith.constant 0 : index
    %7 = vector.load %arg5[%c0_8, %c0_9, %c0_10] : memref<1x128x128xf32, #tpu.memory_space<vmem>>, vector<1x128x128xf32>
    tpu.vector_store %arg5[%c0_8, %c0_9, %c0_10], %6 {strides = array<i32>} : memref<1x128x128xf32, #tpu.memory_space<vmem>>, vector<1x128x128xf32>,
    return
  }
  func.func @transform_0(%arg0: i32, %arg1: i32) -> (i32, i32, i32) {
    %c0_i32 = arith.constant 0 : i32
    %c0_i32_0 = arith.constant 0 : i32
    return %arg0, %arg1, %c0_i32 : i32, i32, i32
  }
  func.func @transform_1(%arg0: i32, %arg1: i32) -> (i32, i32, i32) {
    %c0_i32 = arith.constant 0 : i32
    %c0_i32_0 = arith.constant 0 : i32
    %c0_i32_1 = arith.constant 0 : i32
    return %arg0, %c0_i32, %c0_i32_0 : i32, i32, i32
  }
  func.func @transform_2(%arg0: i32, %arg1: i32) -> (i32, i32, i32) {
    %c0_i32 = arith.constant 0 : i32
    %c0_i32_0 = arith.constant 0 : i32
    %c0_i32_1 = arith.constant 0 : i32
    return %arg0, %c0_i32, %c0_i32_0 : i32, i32, i32
  }
  func.func @transform_3(%arg0: i32, %arg1: i32) -> (i32, i32, i32) {
    %c0_i32 = arith.constant 0 : i32
    %c0_i32_0 = arith.constant 0 : i32
    return %arg0, %arg1, %c0_i32 : i32, i32, i32
  }
}

</mosaic_0001>

<llo_original>
// kernel: switch_norm_2d.2
$region0: #{switch_norm_2d.2}
  #allocation0 [shape = 'u32[]', space=smem, size = 0x4, offset = 0x4, fixed_abs, tag = 'smem constant byte address 0x4 - core index']
  #allocation1 [shape = 'u32[144,128]{1,0:T(1,128)}', space=vmem, size = 0x12000, scoped, tag = 'internal scratch']
  %s0 = inlined_call_operand.hbm [shape: f32[2,128,128], index: 0, kind: input, shape index: {}]
  %s1 = inlined_call_operand.vmem [shape: f32[2,1,128], index: 1, kind: output, shape index: {0}]
  %s2 = inlined_call_operand.vmem [shape: f32[2,1,128], index: 2, kind: output, shape index: {1}]
  %3 = xla_tuple %s1, %s2
  %s4 = sld [smem:[#allocation0]]
  $region53: #{switch_norm_2d.2} parent=0
    _
  %s6 = ssub.s32 1, %s4
  %s7 = scalar_select 0, %s6, %s4
  $region1: #{switch_norm_2d.2} parent=0
    #allocation2 [shape = 'u8[131072]{0}', space=vmem, size = 0x20000, scoped, tag = 'input window, operand 0']
    #allocation3 [shape = 's32[2]{0}', space=sflag, size = 0x8, scoped, tag = 'scoped memory for switch_norm_2d.2']
    %8 = vsyncpa [#allocation3], 0
    %s9 = scalar_lea.sflag [#allocation3], 1
    %10 = vsyncpa %s9, 0
    loop: start=0, step=1, limit=4
    $region2: #{switch_norm_2d.2} parent=1 // loop_pre_header
      _
    $region3: #{switch_norm_2d.2} parent=1 // loop_header
      %s12 = sphi 0, %s16
      %p13 = scmp.ge.s32.totalorder %s12, 4
      %s19 = sphi 0, %s31
      %s20 = sphi 0, %s27
      %s21 = sphi 0, %s19
      %s22 = sphi 0, %s20
      %s23 = sphi 0, %s21
      %s24 = sphi 0, %s22
      %s36 = sphi 0, %s38
      %s39 = sphi 0, %s36
      %s40 = sphi 0, %s39
      %s56 = sphi 0, %s40
      %s62 = sphi 0, %s64
      %s65 = sphi 0, %s62
      %s66 = sphi 0, %s65
      %s82 = sphi 0, %s66
      %s88 = sphi 0, %s90
      %s91 = sphi 0, %s88
      %s92 = sphi 0, %s91
      %s108 = sphi 0, %s92
    $region4: #{switch_norm_2d.2} parent=1 // loop_header_branch
      %15 = sbr.rel (%p13) target = $region8
    $region5: #{switch_norm_2d.2} parent=1 // loop_body
      %s17 = ssub.s32 %s12, 1
      %s18 = ssub.s32 %s12, 2
      %s25 = sadd.s32 1, %s20
      %p26 = scmp.ge.s32.totalorder %s25, 1
      %s27 = scalar_select %p26, 0, %s25
      %s28 = sadd.s32 1, %s19
      %s29 = scalar_select %p26, %s28, %s19
      %p30 = scmp.ge.s32.totalorder %s29, 2
      %s31 = scalar_select %p30, 0, %s29
      %s32 = ssub.s32 %s19, %s31
      %s33 = ssub.s32 %s20, %s27
      %s34 = sor.u32 %s32, %s33
      %p35 = scmp.eq.s32.totalorder %s34, 0
      %s37 = sadd.s32 %s36, 1
      %s38 = scalar_select %p35, %s36, %s37
      %p41 = pneg %p35
      %p42 = scmp.eq.s32.totalorder %s12, 1
      %p43 = por %p41, %p42
      %p44 = scmp.ne.s32.totalorder %s36, %s39
      %p45 = scmp.eq.s32.totalorder %s12, 0
      %p46 = por %p44, %p45
      %p47 = scmp.ne.s32.totalorder %s36, %s39
      %p48 = scmp.eq.s32.totalorder %s17, 1
      %p49 = por %p47, %p48
      %p50 = scmp.ne.s32.totalorder %s39, %s40
      %p51 = scmp.eq.s32.totalorder %s17, 0
      %p52 = por %p50, %p51
      %p53 = scmp.ne.s32.totalorder %s39, %s40
      %p54 = scmp.eq.s32.totalorder %s18, 1
      %p55 = por %p53, %p54
      %p57 = scmp.ne.s32.totalorder %s40, %s56
      %p58 = scmp.eq.s32.totalorder %s18, 0
      %p59 = por %p57, %p58
      %s60 = ssub.s32 %s19, %s31
      %p61 = scmp.eq.s32.totalorder %s60, 0
      %s63 = sadd.s32 %s62, 1
      %s64 = scalar_select %p61, %s62, %s63
      %p67 = pneg %p61
      %p68 = scmp.eq.s32.totalorder %s12, 1
      %p69 = por %p67, %p68
      %p70 = scmp.ne.s32.totalorder %s62, %s65
      %p71 = scmp.eq.s32.totalorder %s12, 0
      %p72 = por %p70, %p71
      %p73 = scmp.ne.s32.totalorder %s62, %s65
      %p74 = scmp.eq.s32.totalorder %s17, 1
      %p75 = por %p73, %p74
      %p76 = scmp.ne.s32.totalorder %s65, %s66
      %p77 = scmp.eq.s32.totalorder %s17, 0
      %p78 = por %p76, %p77
      %p79 = scmp.ne.s32.totalorder %s65, %s66
      %p80 = scmp.eq.s32.totalorder %s18, 1
      %p81 = por %p79, %p80
      %p83 = scmp.ne.s32.totalorder %s66, %s82
      %p84 = scmp.eq.s32.totalorder %s18, 0
      %p85 = por %p83, %p84
      %s86 = ssub.s32 %s19, %s31
      %p87 = scmp.eq.s32.totalorder %s86, 0
      %s89 = sadd.s32 %s88, 1
      %s90 = scalar_select %p87, %s88, %s89
      %p93 = pneg %p87
      %p94 = scmp.eq.s32.totalorder %s12, 1
      %p95 = por %p93, %p94
      %p96 = scmp.ne.s32.totalorder %s88, %s91
      %p97 = scmp.eq.s32.totalorder %s12, 0
      %p98 = por %p96, %p97
      %p99 = scmp.ne.s32.totalorder %s88, %s91
      %p100 = scmp.eq.s32.totalorder %s17, 1
      %p101 = por %p99, %p100
      %p102 = scmp.ne.s32.totalorder %s91, %s92
      %p103 = scmp.eq.s32.totalorder %s17, 0
      %p104 = por %p102, %p103
      %p105 = scmp.ne.s32.totalorder %s91, %s92
      %p106 = scmp.eq.s32.totalorder %s18, 1
      %p107 = por %p105, %p106
      %p109 = scmp.ne.s32.totalorder %s92, %s108
      %p110 = scmp.eq.s32.totalorder %s18, 0
      %p111 = por %p109, %p110
      %p112 = scmp.le.s32.totalorder 1, %s12
      %p113 = scmp.lt.s32.totalorder %s12, 3
      %p114 = pnand %p112, %p113
      %p115 = pneg %p114
      // Predicated region
      $region9: #{switch_norm_2d.2} parent=5 // pred_check
        _
      $region10: #{switch_norm_2d.2} parent=5 // pred_check_branch
        %117 = sbr.rel (%p114) target = $region12
      $region11: #{switch_norm_2d.2} parent=5 // pred_region
        %s118 = ssub.s32 %s12, 1
      $region12: #{switch_norm_2d.2} parent=5 // pred_fallthru
        _
      %p119 = scmp.lt.s32.totalorder %s12, 2
      // Predicated region
      $region13: #{switch_norm_2d.2} parent=5 // pred_check
        %p120 = pneg %p119
      $region14: #{switch_norm_2d.2} parent=5 // pred_check_branch
        %122 = sbr.rel (%p120) target = $region16
      $region15: #{switch_norm_2d.2} parent=5 // pred_region
        // Predicated region
        $region17: #{switch_norm_2d.2} parent=15 // pred_check
          %p123 = pneg %p46
        $region18: #{switch_norm_2d.2} parent=15 // pred_check_branch
          %125 = sbr.rel (%p123) target = $region20
        $region19: #{switch_norm_2d.2} parent=15 // pred_region
          %s126 = sand.u32 %s36, 1
          %s127 = scalar_lea.sflag [#allocation3], %s126
          %s128 = sand.u32 %s36, 1
          %s129 = smul.addr %s128, 128
          %s130 = scalar_lea.vmem [#allocation2], %s129
          %s131 = smul.u32 16, %s20
          %s133 = ssub.s32 2048, 2048
          %134 = vsyncadd %s127, %s133
          %s135 = smul.addr %s19, 16
          %s136 = sadd.s32 %s131, %s135
          %s137 = smul.addr %s136, 128
          %s138 = scalar_lea.hbm %s0, %s137
          %s139 = sshll.u32 %s130, 4
          %s140 = int_to_ptr.vmem [resolvable:$true] %s139
          %145 = dma.hbm_to_vmem [thread:$0]  %s138, 2048, %s140, %s127, 128, 128, 8
        $region20: #{switch_norm_2d.2} parent=15 // pred_fallthru
          _
      $region16: #{switch_norm_2d.2} parent=5 // pred_fallthru
        _
      %p146 = scmp.le.s32.totalorder 1, %s12
      %p147 = scmp.lt.s32.totalorder %s12, 3
      %p148 = pnand %p146, %p147
      %p149 = pneg %p148
      // Predicated region
      $region21: #{switch_norm_2d.2} parent=5 // pred_check
        _
      $region22: #{switch_norm_2d.2} parent=5 // pred_check_branch
        %151 = sbr.rel (%p148) target = $region24
      $region23: #{switch_norm_2d.2} parent=5 // pred_region
        %s152 = ssub.s32 %s12, 1
        %s153 = sand.u32 %s39, 1
        %s154 = scalar_lea.sflag [#allocation3], %s153
        %s155 = sand.u32 %s39, 1
        %s156 = smul.addr %s155, 128
        %s157 = scalar_lea.vmem [#allocation2], %s156
        // Predicated region
        $region25: #{switch_norm_2d.2} parent=23 // pred_check
          %p158 = pneg %p52
        $region26: #{switch_norm_2d.2} parent=23 // pred_check_branch
          %160 = sbr.rel (%p158) target = $region28
        $region27: #{switch_norm_2d.2} parent=23 // pred_region
          %161 = dma.done %s154, 2048
        $region28: #{switch_norm_2d.2} parent=23 // pred_fallthru
          _
        %s162 = sand.u32 %s39, 1
        %s163 = scalar_lea.sflag [#allocation3], %s162
        %s164 = sand.u32 %s39, 1
        %s165 = smul.addr %s164, 128
        %s166 = scalar_lea.vmem [#allocation2], %s165
        %p167 = pneg %p52
        %p168 = pneg %p49
        %p169 = pneg %p78
        %p170 = pneg %p75
        %p171 = scmp.lt.s32.totalorder %s21, 1
        %s172 = scalar_select %p171, %s21, 1
        %s173 = scalar_lea.vmem %s1, %s172
        %p174 = pneg %p104
        %p175 = pneg %p101
        %p176 = scmp.lt.s32.totalorder %s21, 1
        %s177 = scalar_select %p176, %s21, 1
        %s178 = scalar_lea.vmem %s2, %s177
        %s179 = smul.u32 16, %s22
        %p180 = scmp.lt.s32.totalorder %s21, 1
        %s181 = scalar_select %p180, %s21, 1
        %s182 = scalar_lea.vmem %s1, %s181
        %p183 = scmp.lt.s32.totalorder %s21, 1
        %s184 = scalar_select %p183, %s21, 1
        %s185 = scalar_lea.vmem %s2, %s184
        %p186 = scmp.eq.s32.totalorder %s22, 0
        // Predicated region
        $region29: #{switch_norm_2d.2} parent=23 // pred_check
          %p187 = pneg %p186
        $region30: #{switch_norm_2d.2} parent=23 // pred_check_branch
          %189 = sbr.rel (%p187) target = $region32
        $region31: #{switch_norm_2d.2} parent=23 // pred_region
          %190 = vst [vmem:[%s182] sm:$0x1] 0.0
          %191 = vst [vmem:[%s185] sm:$0x1] 0.0
        $region32: #{switch_norm_2d.2} parent=23 // pred_fallthru
          _
        %v192 = vld [vmem:[%s157] sm:$0xff]
        %v193 = vld [vmem:[%s157 + $0x8] sm:$0xff]
        %v194 = vld [vmem:[%s157 + $0x10] sm:$0xff]
        %v195 = vld [vmem:[%s157 + $0x18] sm:$0xff]
        %v196 = vld [vmem:[%s157 + $0x20] sm:$0xff]
        %v197 = vld [vmem:[%s157 + $0x28] sm:$0xff]
        %v198 = vld [vmem:[%s157 + $0x30] sm:$0xff]
        %v199 = vld [vmem:[%s157 + $0x38] sm:$0xff]
        %v200 = vld [vmem:[%s157 + $0x40] sm:$0xff]
        %v201 = vld [vmem:[%s157 + $0x48] sm:$0xff]
        %v202 = vld [vmem:[%s157 + $0x50] sm:$0xff]
        %v203 = vld [vmem:[%s157 + $0x58] sm:$0xff]
        %v204 = vld [vmem:[%s157 + $0x60] sm:$0xff]
        %v205 = vld [vmem:[%s157 + $0x68] sm:$0xff]
        %v206 = vld [vmem:[%s157 + $0x70] sm:$0xff]
        %v207 = vld [vmem:[%s157 + $0x78] sm:$0xff]
        %v208 = vld [vmem:[%s182] sm:$0x1]
        %v209 = vadd.f32 %v192, %v193
        %v210 = vadd.f32 %v209, %v194
        %v211 = vadd.f32 %v210, %v195
        %v212 = vadd.f32 %v211, %v196
        %v213 = vadd.f32 %v212, %v197
        %v214 = vadd.f32 %v213, %v198
        %v215 = vadd.f32 %v214, %v199
        %v216 = vadd.f32 %v215, %v200
        %v217 = vadd.f32 %v216, %v201
        %v218 = vadd.f32 %v217, %v202
        %v219 = vadd.f32 %v218, %v203
        %v220 = vadd.f32 %v219, %v204
        %v221 = vadd.f32 %v220, %v205
        %v222 = vadd.f32 %v221, %v206
        %v223 = vadd.f32 %v222, %v207
        %v224 = vrot.slane %v223, 4
        %v225 = vadd.f32 %v223, %v224
        %v226 = vrot.slane %v225, 2
        %v227 = vadd.f32 %v225, %v226
        %v228 = vrot.slane %v227, 1
        %v229 = vadd.f32 %v227, %v228
        %v230 = vadd.f32 %v208, %v229
        %231 = vst [vmem:[%s182] sm:$0x1] %v230
        %v232 = vld [vmem:[%s185] sm:$0x1]
        %v233 = vmul.f32 %v192, %v192
        %v234 = vmul.f32 %v193, %v193
        %v235 = vmul.f32 %v194, %v194
        %v236 = vmul.f32 %v195, %v195
        %v237 = vmul.f32 %v196, %v196
        %v238 = vmul.f32 %v197, %v197
        %v239 = vmul.f32 %v198, %v198
        %v240 = vmul.f32 %v199, %v199
        %v241 = vmul.f32 %v200, %v200
        %v242 = vmul.f32 %v201, %v201
        %v243 = vmul.f32 %v202, %v202
        %v244 = vmul.f32 %v203, %v203
        %v245 = vmul.f32 %v204, %v204
        %v246 = vmul.f32 %v205, %v205
        %v247 = vmul.f32 %v206, %v206
        %v248 = vmul.f32 %v207, %v207
        %v249 = vadd.f32 %v233, %v234
        %v250 = vadd.f32 %v249, %v235
        %v251 = vadd.f32 %v250, %v236
        %v252 = vadd.f32 %v251, %v237
        %v253 = vadd.f32 %v252, %v238
        %v254 = vadd.f32 %v253, %v239
        %v255 = vadd.f32 %v254, %v240
        %v256 = vadd.f32 %v255, %v241
        %v257 = vadd.f32 %v256, %v242
        %v258 = vadd.f32 %v257, %v243
        %v259 = vadd.f32 %v258, %v244
        %v260 = vadd.f32 %v259, %v245
        %v261 = vadd.f32 %v260, %v246
        %v262 = vadd.f32 %v261, %v247
        %v263 = vadd.f32 %v262, %v248
        %v264 = vrot.slane %v263, 4
        %v265 = vadd.f32 %v263, %v264
        %v266 = vrot.slane %v265, 2
        %v267 = vadd.f32 %v265, %v266
        %v268 = vrot.slane %v267, 1
        %v269 = vadd.f32 %v267, %v268
        %v270 = vadd.f32 %v232, %v269
        %271 = vst [vmem:[%s185] sm:$0x1] %v270
        %p272 = scmp.lt.s32.totalorder %s21, 1
        %s273 = scalar_select %p272, %s21, 1
        %s274 = scalar_lea.vmem %s1, %s273
        %p275 = scmp.lt.s32.totalorder %s21, 1
        %s276 = scalar_select %p275, %s21, 1
        %s277 = scalar_lea.vmem %s2, %s276
        // Predicated region
        $region33: #{switch_norm_2d.2} parent=23 // pred_check
          %p278 = pneg %p75
        $region34: #{switch_norm_2d.2} parent=23 // pred_check_branch
          %280 = sbr.rel (%p278) target = $region36
        $region35: #{switch_norm_2d.2} parent=23 // pred_region
          _
        $region36: #{switch_norm_2d.2} parent=23 // pred_fallthru
          _
        // Predicated region
        $region37: #{switch_norm_2d.2} parent=23 // pred_check
          %p281 = pneg %p101
        $region38: #{switch_norm_2d.2} parent=23 // pred_check_branch
          %283 = sbr.rel (%p281) target = $region40
        $region39: #{switch_norm_2d.2} parent=23 // pred_region
          _
        $region40: #{switch_norm_2d.2} parent=23 // pred_fallthru
          _
      $region24: #{switch_norm_2d.2} parent=5 // pred_fallthru
        _
      %p284 = scmp.le.s32.totalorder 2, %s12
      // Predicated region
      $region41: #{switch_norm_2d.2} parent=5 // pred_check
        %p285 = pneg %p284
      $region42: #{switch_norm_2d.2} parent=5 // pred_check_branch
        %287 = sbr.rel (%p285) target = $region44
      $region43: #{switch_norm_2d.2} parent=5 // pred_region
        %s288 = ssub.s32 %s12, 2
        // Predicated region
        $region45: #{switch_norm_2d.2} parent=43 // pred_check
          %p289 = pneg %p81
        $region46: #{switch_norm_2d.2} parent=43 // pred_check_branch
          %291 = sbr.rel (%p289) target = $region48
        $region47: #{switch_norm_2d.2} parent=43 // pred_region
          %p292 = scmp.lt.s32.totalorder %s23, 1
          %s293 = scalar_select %p292, %s23, 1
          %s294 = scalar_lea.vmem %s1, %s293
        $region48: #{switch_norm_2d.2} parent=43 // pred_fallthru
          _
        // Predicated region
        $region49: #{switch_norm_2d.2} parent=43 // pred_check
          %p295 = pneg %p107
        $region50: #{switch_norm_2d.2} parent=43 // pred_check_branch
          %297 = sbr.rel (%p295) target = $region52
        $region51: #{switch_norm_2d.2} parent=43 // pred_region
          %p298 = scmp.lt.s32.totalorder %s23, 1
          %s299 = scalar_select %p298, %s23, 1
          %s300 = scalar_lea.vmem %s2, %s299
        $region52: #{switch_norm_2d.2} parent=43 // pred_fallthru
          _
      $region44: #{switch_norm_2d.2} parent=5 // pred_fallthru
        _
    $region6: #{switch_norm_2d.2} parent=1 // loop_footer
      %s16 = sadd.s32 1, %s12
    $region7: #{switch_norm_2d.2} parent=1 // loop_footer_branch
      %11 = sbr.rel target = $region3
    $region8: #{switch_norm_2d.2} parent=1 // loop_exit
      _
    %301 = vsyncpa [#allocation3], 1
    %s302 = scalar_lea.sflag [#allocation3], 1
    %303 = vsyncpa %s302, 1

// kernel: switch_norm_2d.3
$region0: #{switch_norm_2d.3}
  #allocation0 [shape = 'u32[]', space=smem, size = 0x4, offset = 0x4, fixed_abs, tag = 'smem constant byte address 0x4 - core index']
  #allocation1 [shape = 'u32[144,128]{1,0:T(1,128)}', space=vmem, size = 0x12000, scoped, tag = 'internal scratch']
  %s0 = inlined_call_operand.vmem [shape: f32[2,128,128], index: 0, kind: input, shape index: {}]
  %s1 = inlined_call_operand.vmem [shape: f32[2,1,128], index: 1, kind: input, shape index: {}]
  %s2 = inlined_call_operand.vmem [shape: f32[2,1,128], index: 2, kind: input, shape index: {}]
  %s3 = inlined_call_operand.hbm [shape: f32[2,128,128], index: 3, kind: output, shape index: {}]
  %s4 = sld [smem:[#allocation0]]
  $region45: #{switch_norm_2d.3} parent=0
    _
  %s6 = ssub.s32 1, %s4
  %s7 = scalar_select 0, %s6, %s4
  $region1: #{switch_norm_2d.3} parent=0
    #allocation2 [shape = 'u8[131072]{0}', space=vmem, size = 0x20000, scoped, tag = 'output window, operand 0']
    #allocation3 [shape = 's32[2]{0}', space=sflag, size = 0x8, scoped, tag = 'scoped memory for switch_norm_2d.3']
    %8 = vsyncpa [#allocation3], 0
    %s9 = scalar_lea.sflag [#allocation3], 1
    %10 = vsyncpa %s9, 0
    loop: start=0, step=1, limit=4
    $region2: #{switch_norm_2d.3} parent=1 // loop_pre_header
      _
    $region3: #{switch_norm_2d.3} parent=1 // loop_header
      %s12 = sphi 0, %s16
      %p13 = scmp.ge.s32.totalorder %s12, 4
      %s19 = sphi 0, %s31
      %s20 = sphi 0, %s27
      %s21 = sphi 0, %s19
      %s22 = sphi 0, %s20
      %s23 = sphi 0, %s21
      %s24 = sphi 0, %s22
      %s36 = sphi 0, %s38
      %s39 = sphi 0, %s36
      %s40 = sphi 0, %s39
      %s56 = sphi 0, %s40
      %s62 = sphi 0, %s64
      %s65 = sphi 0, %s62
      %s66 = sphi 0, %s65
      %s82 = sphi 0, %s66
      %s88 = sphi 0, %s90
      %s91 = sphi 0, %s88
      %s92 = sphi 0, %s91
      %s108 = sphi 0, %s92
      %s116 = sphi 0, %s118
      %s119 = sphi 0, %s116
      %s120 = sphi 0, %s119
      %s136 = sphi 0, %s120
    $region4: #{switch_norm_2d.3} parent=1 // loop_header_branch
      %15 = sbr.rel (%p13) target = $region8
    $region5: #{switch_norm_2d.3} parent=1 // loop_body
      %s17 = ssub.s32 %s12, 1
      %s18 = ssub.s32 %s12, 2
      %s25 = sadd.s32 1, %s20
      %p26 = scmp.ge.s32.totalorder %s25, 1
      %s27 = scalar_select %p26, 0, %s25
      %s28 = sadd.s32 1, %s19
      %s29 = scalar_select %p26, %s28, %s19
      %p30 = scmp.ge.s32.totalorder %s29, 2
      %s31 = scalar_select %p30, 0, %s29
      %s32 = ssub.s32 %s19, %s31
      %s33 = ssub.s32 %s20, %s27
      %s34 = sor.u32 %s32, %s33
      %p35 = scmp.eq.s32.totalorder %s34, 0
      %s37 = sadd.s32 %s36, 1
      %s38 = scalar_select %p35, %s36, %s37
      %p41 = pneg %p35
      %p42 = scmp.eq.s32.totalorder %s12, 1
      %p43 = por %p41, %p42
      %p44 = scmp.ne.s32.totalorder %s36, %s39
      %p45 = scmp.eq.s32.totalorder %s12, 0
      %p46 = por %p44, %p45
      %p47 = scmp.ne.s32.totalorder %s36, %s39
      %p48 = scmp.eq.s32.totalorder %s17, 1
      %p49 = por %p47, %p48
      %p50 = scmp.ne.s32.totalorder %s39, %s40
      %p51 = scmp.eq.s32.totalorder %s17, 0
      %p52 = por %p50, %p51
      %p53 = scmp.ne.s32.totalorder %s39, %s40
      %p54 = scmp.eq.s32.totalorder %s18, 1
      %p55 = por %p53, %p54
      %p57 = scmp.ne.s32.totalorder %s40, %s56
      %p58 = scmp.eq.s32.totalorder %s18, 0
      %p59 = por %p57, %p58
      %s60 = ssub.s32 %s19, %s31
      %p61 = scmp.eq.s32.totalorder %s60, 0
      %s63 = sadd.s32 %s62, 1
      %s64 = scalar_select %p61, %s62, %s63
      %p67 = pneg %p61
      %p68 = scmp.eq.s32.totalorder %s12, 1
      %p69 = por %p67, %p68
      %p70 = scmp.ne.s32.totalorder %s62, %s65
      %p71 = scmp.eq.s32.totalorder %s12, 0
      %p72 = por %p70, %p71
      %p73 = scmp.ne.s32.totalorder %s62, %s65
      %p74 = scmp.eq.s32.totalorder %s17, 1
      %p75 = por %p73, %p74
      %p76 = scmp.ne.s32.totalorder %s65, %s66
      %p77 = scmp.eq.s32.totalorder %s17, 0
      %p78 = por %p76, %p77
      %p79 = scmp.ne.s32.totalorder %s65, %s66
      %p80 = scmp.eq.s32.totalorder %s18, 1
      %p81 = por %p79, %p80
      %p83 = scmp.ne.s32.totalorder %s66, %s82
      %p84 = scmp.eq.s32.totalorder %s18, 0
      %p85 = por %p83, %p84
      %s86 = ssub.s32 %s19, %s31
      %p87 = scmp.eq.s32.totalorder %s86, 0
      %s89 = sadd.s32 %s88, 1
      %s90 = scalar_select %p87, %s88, %s89
      %p93 = pneg %p87
      %p94 = scmp.eq.s32.totalorder %s12, 1
      %p95 = por %p93, %p94
      %p96 = scmp.ne.s32.totalorder %s88, %s91
      %p97 = scmp.eq.s32.totalorder %s12, 0
      %p98 = por %p96, %p97
      %p99 = scmp.ne.s32.totalorder %s88, %s91
      %p100 = scmp.eq.s32.totalorder %s17, 1
      %p101 = por %p99, %p100
      %p102 = scmp.ne.s32.totalorder %s91, %s92
      %p103 = scmp.eq.s32.totalorder %s17, 0
      %p104 = por %p102, %p103
      %p105 = scmp.ne.s32.totalorder %s91, %s92
      %p106 = scmp.eq.s32.totalorder %s18, 1
      %p107 = por %p105, %p106
      %p109 = scmp.ne.s32.totalorder %s92, %s108
      %p110 = scmp.eq.s32.totalorder %s18, 0
      %p111 = por %p109, %p110
      %s112 = ssub.s32 %s19, %s31
      %s113 = ssub.s32 %s20, %s27
      %s114 = sor.u32 %s112, %s113
      %p115 = scmp.eq.s32.totalorder %s114, 0
      %s117 = sadd.s32 %s116, 1
      %s118 = scalar_select %p115, %s116, %s117
      %p121 = pneg %p115
      %p122 = scmp.eq.s32.totalorder %s12, 1
      %p123 = por %p121, %p122
      %p124 = scmp.ne.s32.totalorder %s116, %s119
      %p125 = scmp.eq.s32.totalorder %s12, 0
      %p126 = por %p124, %p125
      %p127 = scmp.ne.s32.totalorder %s116, %s119
      %p128 = scmp.eq.s32.totalorder %s17, 1
      %p129 = por %p127, %p128
      %p130 = scmp.ne.s32.totalorder %s119, %s120
      %p131 = scmp.eq.s32.totalorder %s17, 0
      %p132 = por %p130, %p131
      %p133 = scmp.ne.s32.totalorder %s119, %s120
      %p134 = scmp.eq.s32.totalorder %s18, 1
      %p135 = por %p133, %p134
      %p137 = scmp.ne.s32.totalorder %s120, %s136
      %p138 = scmp.eq.s32.totalorder %s18, 0
      %p139 = por %p137, %p138
      %p140 = scmp.le.s32.totalorder 1, %s12
      %p141 = scmp.lt.s32.totalorder %s12, 3
      %p142 = pnand %p140, %p141
      %p143 = pneg %p142
      // Predicated region
      $region9: #{switch_norm_2d.3} parent=5 // pred_check
        _
      $region10: #{switch_norm_2d.3} parent=5 // pred_check_branch
        %145 = sbr.rel (%p142) target = $region12
      $region11: #{switch_norm_2d.3} parent=5 // pred_region
        %s146 = ssub.s32 %s12, 1
      $region12: #{switch_norm_2d.3} parent=5 // pred_fallthru
        _
      %p147 = scmp.lt.s32.totalorder %s12, 2
      // Predicated region
      $region13: #{switch_norm_2d.3} parent=5 // pred_check
        %p148 = pneg %p147
      $region14: #{switch_norm_2d.3} parent=5 // pred_check_branch
        %150 = sbr.rel (%p148) target = $region16
      $region15: #{switch_norm_2d.3} parent=5 // pred_region
        // Predicated region
        $region17: #{switch_norm_2d.3} parent=15 // pred_check
          %p151 = pneg %p46
        $region18: #{switch_norm_2d.3} parent=15 // pred_check_branch
          %153 = sbr.rel (%p151) target = $region20
        $region19: #{switch_norm_2d.3} parent=15 // pred_region
          %s154 = smul.u32 16, %s20
          %p155 = scmp.lt.s32.totalorder %s19, 1
          %s156 = scalar_select %p155, %s19, 1
          %p157 = scmp.lt.s32.totalorder %s154, 15
          %s158 = scalar_select %p157, %s154, 15
          %s159 = smul.addr %s156, 16
          %s160 = sadd.s32 %s158, %s159
          %s161 = smul.addr %s160, 8
          %s162 = scalar_lea.vmem %s0, %s161
          %s163 = smul.u32 16, %s20
        $region20: #{switch_norm_2d.3} parent=15 // pred_fallthru
          _
        // Predicated region
        $region21: #{switch_norm_2d.3} parent=15 // pred_check
          %p164 = pneg %p72
        $region22: #{switch_norm_2d.3} parent=15 // pred_check_branch
          %166 = sbr.rel (%p164) target = $region24
        $region23: #{switch_norm_2d.3} parent=15 // pred_region
          %p167 = scmp.lt.s32.totalorder %s19, 1
          %s168 = scalar_select %p167, %s19, 1
          %s169 = scalar_lea.vmem %s1, %s168
        $region24: #{switch_norm_2d.3} parent=15 // pred_fallthru
          _
        // Predicated region
        $region25: #{switch_norm_2d.3} parent=15 // pred_check
          %p170 = pneg %p98
        $region26: #{switch_norm_2d.3} parent=15 // pred_check_branch
          %172 = sbr.rel (%p170) target = $region28
        $region27: #{switch_norm_2d.3} parent=15 // pred_region
          %p173 = scmp.lt.s32.totalorder %s19, 1
          %s174 = scalar_select %p173, %s19, 1
          %s175 = scalar_lea.vmem %s2, %s174
        $region28: #{switch_norm_2d.3} parent=15 // pred_fallthru
          _
      $region16: #{switch_norm_2d.3} parent=5 // pred_fallthru
        _
      %p176 = scmp.le.s32.totalorder 1, %s12
      %p177 = scmp.lt.s32.totalorder %s12, 3
      %p178 = pnand %p176, %p177
      %p179 = pneg %p178
      // Predicated region
      $region29: #{switch_norm_2d.3} parent=5 // pred_check
        _
      $region30: #{switch_norm_2d.3} parent=5 // pred_check_branch
        %181 = sbr.rel (%p178) target = $region32
      $region31: #{switch_norm_2d.3} parent=5 // pred_region
        %s182 = ssub.s32 %s12, 1
        %s183 = smul.u32 16, %s22
        %p184 = scmp.lt.s32.totalorder %s21, 1
        %s185 = scalar_select %p184, %s21, 1
        %p186 = scmp.lt.s32.totalorder %s183, 15
        %s187 = scalar_select %p186, %s183, 15
        %s188 = smul.addr %s185, 16
        %s189 = sadd.s32 %s187, %s188
        %s190 = smul.addr %s189, 8
        %s191 = scalar_lea.vmem %s0, %s190
        %p192 = pneg %p52
        %p193 = pneg %p49
        %p194 = scmp.lt.s32.totalorder %s21, 1
        %s195 = scalar_select %p194, %s21, 1
        %s196 = scalar_lea.vmem %s1, %s195
        %p197 = pneg %p78
        %p198 = pneg %p75
        %p199 = scmp.lt.s32.totalorder %s21, 1
        %s200 = scalar_select %p199, %s21, 1
        %s201 = scalar_lea.vmem %s2, %s200
        %p202 = pneg %p104
        %p203 = pneg %p101
        %p204 = pneg %p132
        %p205 = pneg %p129
        %s206 = sand.u32 %s119, 1
        %s207 = scalar_lea.sflag [#allocation3], %s206
        %s208 = sand.u32 %s119, 1
        %s209 = smul.addr %s208, 128
        %s210 = scalar_lea.vmem [#allocation2], %s209
        %s211 = smul.u32 16, %s22
        %p212 = scmp.lt.s32.totalorder %s21, 1
        %s213 = scalar_select %p212, %s21, 1
        %p214 = scmp.lt.s32.totalorder %s211, 15
        %s215 = scalar_select %p214, %s211, 15
        %s216 = smul.addr %s213, 16
        %s217 = sadd.s32 %s215, %s216
        %s218 = smul.addr %s217, 8
        %s219 = scalar_lea.vmem %s0, %s218
        %s220 = smul.u32 16, %s22
        %p221 = scmp.lt.s32.totalorder %s21, 1
        %s222 = scalar_select %p221, %s21, 1
        %s223 = scalar_lea.vmem %s1, %s222
        %p224 = scmp.lt.s32.totalorder %s21, 1
        %s225 = scalar_select %p224, %s21, 1
        %s226 = scalar_lea.vmem %s2, %s225
        %s227 = smul.u32 16, %s22
        %v228 = vld [vmem:[%s219] sm:$0xff]
        %v229 = vld [vmem:[%s219 + $0x8] sm:$0xff]
        %v230 = vld [vmem:[%s219 + $0x10] sm:$0xff]
        %v231 = vld [vmem:[%s219 + $0x18] sm:$0xff]
        %v232 = vld [vmem:[%s219 + $0x20] sm:$0xff]
        %v233 = vld [vmem:[%s219 + $0x28] sm:$0xff]
        %v234 = vld [vmem:[%s219 + $0x30] sm:$0xff]
        %v235 = vld [vmem:[%s219 + $0x38] sm:$0xff]
        %v236 = vld [vmem:[%s219 + $0x40] sm:$0xff]
        %v237 = vld [vmem:[%s219 + $0x48] sm:$0xff]
        %v238 = vld [vmem:[%s219 + $0x50] sm:$0xff]
        %v239 = vld [vmem:[%s219 + $0x58] sm:$0xff]
        %v240 = vld [vmem:[%s219 + $0x60] sm:$0xff]
        %v241 = vld [vmem:[%s219 + $0x68] sm:$0xff]
        %v242 = vld [vmem:[%s219 + $0x70] sm:$0xff]
        %v243 = vld [vmem:[%s219 + $0x78] sm:$0xff]
        %v244 = vld [vmem:[%s223] sm:$0x1]
        %v246 = vlaneseq
        %v247 = vshrl.u32 %v246, 7
        %v248 = vsub.s32 0, %v247
        %v249 = vrot.slane %v244, %v248
        %v251 = vmul.f32 %v228, %v249
        %v252 = vmul.f32 %v229, %v249
        %v253 = vmul.f32 %v230, %v249
        %v254 = vmul.f32 %v231, %v249
        %v255 = vmul.f32 %v232, %v249
        %v256 = vmul.f32 %v233, %v249
        %v257 = vmul.f32 %v234, %v249
        %v258 = vmul.f32 %v235, %v249
        %v259 = vmul.f32 %v236, %v249
        %v260 = vmul.f32 %v237, %v249
        %v261 = vmul.f32 %v238, %v249
        %v262 = vmul.f32 %v239, %v249
        %v263 = vmul.f32 %v240, %v249
        %v264 = vmul.f32 %v241, %v249
        %v265 = vmul.f32 %v242, %v249
        %v266 = vmul.f32 %v243, %v249
        %v267 = vld [vmem:[%s226] sm:$0x1]
        %v269 = vlaneseq
        %v270 = vshrl.u32 %v269, 7
        %v271 = vsub.s32 0, %v270
        %v272 = vrot.slane %v267, %v271
        %v274 = vadd.f32 %v251, %v272
        %v275 = vadd.f32 %v252, %v272
        %v276 = vadd.f32 %v253, %v272
        %v277 = vadd.f32 %v254, %v272
        %v278 = vadd.f32 %v255, %v272
        %v279 = vadd.f32 %v256, %v272
        %v280 = vadd.f32 %v257, %v272
        %v281 = vadd.f32 %v258, %v272
        %v282 = vadd.f32 %v259, %v272
        %v283 = vadd.f32 %v260, %v272
        %v284 = vadd.f32 %v261, %v272
        %v285 = vadd.f32 %v262, %v272
        %v286 = vadd.f32 %v263, %v272
        %v287 = vadd.f32 %v264, %v272
        %v288 = vadd.f32 %v265, %v272
        %v289 = vadd.f32 %v266, %v272
        %290 = vst [vmem:[%s210] sm:$0xff] %v274
        %291 = vst [vmem:[%s210 + $0x8] sm:$0xff] %v275
        %292 = vst [vmem:[%s210 + $0x10] sm:$0xff] %v276
        %293 = vst [vmem:[%s210 + $0x18] sm:$0xff] %v277
        %294 = vst [vmem:[%s210 + $0x20] sm:$0xff] %v278
        %295 = vst [vmem:[%s210 + $0x28] sm:$0xff] %v279
        %296 = vst [vmem:[%s210 + $0x30] sm:$0xff] %v280
        %297 = vst [vmem:[%s210 + $0x38] sm:$0xff] %v281
        %298 = vst [vmem:[%s210 + $0x40] sm:$0xff] %v282
        %299 = vst [vmem:[%s210 + $0x48] sm:$0xff] %v283
        %300 = vst [vmem:[%s210 + $0x50] sm:$0xff] %v284
        %301 = vst [vmem:[%s210 + $0x58] sm:$0xff] %v285
        %302 = vst [vmem:[%s210 + $0x60] sm:$0xff] %v286
        %303 = vst [vmem:[%s210 + $0x68] sm:$0xff] %v287
        %304 = vst [vmem:[%s210 + $0x70] sm:$0xff] %v288
        %305 = vst [vmem:[%s210 + $0x78] sm:$0xff] %v289
        %s306 = sand.u32 %s119, 1
        %s307 = scalar_lea.sflag [#allocation3], %s306
        %s308 = sand.u32 %s119, 1
        %s309 = smul.addr %s308, 128
        %s310 = scalar_lea.vmem [#allocation2], %s309
        // Predicated region
        $region33: #{switch_norm_2d.3} parent=31 // pred_check
          %p311 = pneg %p129
        $region34: #{switch_norm_2d.3} parent=31 // pred_check_branch
          %313 = sbr.rel (%p311) target = $region36
        $region35: #{switch_norm_2d.3} parent=31 // pred_region
          %s314 = smul.u32 16, %s22
          %s316 = ssub.s32 2048, 2048
          %317 = vsyncadd %s307, %s316
          %s318 = smul.addr %s21, 16
          %s319 = sadd.s32 %s314, %s318
          %s320 = smul.addr %s319, 128
          %s321 = scalar_lea.hbm %s3, %s320
          %s322 = sshll.u32 %s310, 4
          %s323 = int_to_ptr.vmem [resolvable:$true] %s322
          %328 = dma.vmem_to_hbm [thread:$0]  %s323, 2048, %s321, %s307, 128, 128, 8
        $region36: #{switch_norm_2d.3} parent=31 // pred_fallthru
          _
      $region32: #{switch_norm_2d.3} parent=5 // pred_fallthru
        _
      %p329 = scmp.le.s32.totalorder 2, %s12
      // Predicated region
      $region37: #{switch_norm_2d.3} parent=5 // pred_check
        %p330 = pneg %p329
      $region38: #{switch_norm_2d.3} parent=5 // pred_check_branch
        %332 = sbr.rel (%p330) target = $region40
      $region39: #{switch_norm_2d.3} parent=5 // pred_region
        %s333 = ssub.s32 %s12, 2
        // Predicated region
        $region41: #{switch_norm_2d.3} parent=39 // pred_check
          %p334 = pneg %p135
        $region42: #{switch_norm_2d.3} parent=39 // pred_check_branch
          %336 = sbr.rel (%p334) target = $region44
        $region43: #{switch_norm_2d.3} parent=39 // pred_region
          %s337 = sand.u32 %s120, 1
          %s338 = scalar_lea.sflag [#allocation3], %s337
          %s339 = sand.u32 %s120, 1
          %s340 = smul.addr %s339, 128
          %s341 = scalar_lea.vmem [#allocation2], %s340
          %342 = dma.done %s338, 2048
        $region44: #{switch_norm_2d.3} parent=39 // pred_fallthru
          _
      $region40: #{switch_norm_2d.3} parent=5 // pred_fallthru
        _
    $region6: #{switch_norm_2d.3} parent=1 // loop_footer
      %s16 = sadd.s32 1, %s12
    $region7: #{switch_norm_2d.3} parent=1 // loop_footer_branch
      %11 = sbr.rel target = $region3
    $region8: #{switch_norm_2d.3} parent=1 // loop_exit
      _
    %343 = vsyncpa [#allocation3], 1
    %s344 = scalar_lea.sflag [#allocation3], 1
    %345 = vsyncpa %s344, 1

</llo_original>
